<compile_context>
chip_gen: v6e
topology: v6e:2x2x1
jax: 0.10.0
libtpu: 0.0.40
codegen_flags: <defaults>
</compile_context>

<pallas_src>
import functools

import jax
import jax.numpy as jnp
from jax.experimental import pallas as pl
from jax.experimental.pallas import tpu as pltpu

_BN_EPS = 1e-5
_NORM_FUSE_MAX_K = 2048  # max (padded) K for fusing row-normalization into the matmul


def _round_up(a, b):
    return (a + b - 1) // b * b


# ----------------------------------------------------------------------------
# Kernel 1: batched row-wise L2 normalization  (F.normalize(x, dim=-1))
# ----------------------------------------------------------------------------
def _l2norm_kernel(x_ref, o_ref):
    x = x_ref[0].astype(jnp.float32)
    norm = jnp.sqrt(jnp.sum(x * x, axis=-1, keepdims=True))
    inv = 1.0 / jnp.maximum(norm, 1e-12)
    o_ref[0] = (x * inv).astype(o_ref.dtype)


def l2_normalize_batched(x, *, tm=256):
    """Row-wise L2 normalization of a (H, M, D) array via a Pallas kernel."""
    H, M, D = x.shape
    tm = min(tm, _round_up(M, 8))
    Mp = _round_up(M, tm)
    Dp = _round_up(D, 128)
    xp = jnp.pad(x, ((0, 0), (0, Mp - M), (0, Dp - D))) if (Mp, Dp) != (M, D) else x

    out = pl.pallas_call(
        _l2norm_kernel,
        out_shape=jax.ShapeDtypeStruct((H, Mp, Dp), x.dtype),
        grid_spec=pltpu.PrefetchScalarGridSpec(
            num_scalar_prefetch=0,
            grid=(H, Mp // tm),
            in_specs=[pl.BlockSpec((1, tm, Dp), lambda h, i: (h, i, 0))],
            out_specs=pl.BlockSpec((1, tm, Dp), lambda h, i: (h, i, 0)),
        ),
        compiler_params=pltpu.CompilerParams(
            dimension_semantics=("parallel", "parallel")),
    )(xp)
    return out[:, :M, :D]


# ----------------------------------------------------------------------------
# Kernel 2: batched tiled matmul with fused epilogue
#   y[h] = act( (maybe_normalize(x[bh]) @ wt[h]) * scale[h] + shift[h] )
# ----------------------------------------------------------------------------
def _bmm_kernel(x_ref, wt_ref, scale_ref, shift_ref, o_ref, acc_ref,
                *, apply_affine, apply_relu, normalize_x):
    k = pl.program_id(3)

    @pl.when(k == 0)
    def _():
        acc_ref[...] = jnp.zeros_like(acc_ref)

    x = x_ref[0]
    if normalize_x:
        # Only used when the whole (padded) reduction dim is a single K block.
        xf = x.astype(jnp.float32)
        norm = jnp.sqrt(jnp.sum(xf * xf, axis=-1, keepdims=True))
        x = (xf * (1.0 / jnp.maximum(norm, 1e-12))).astype(x.dtype)

    acc_ref[...] += jnp.dot(x, wt_ref[0], preferred_element_type=jnp.float32)

    @pl.when(k == pl.num_programs(3) - 1)
    def _():
        out = acc_ref[...]
        if apply_affine:
            out = out * scale_ref[0] + shift_ref[0]
        if apply_relu:
            out = jnp.maximum(out, 0.0)
        o_ref[0] = out.astype(o_ref.dtype)


def fused_linear_batched(x, wt, scale=None, shift=None, *, relu=False,
                         normalize_x=False, compute_dtype=None,
                         tm=256, tn=256, tk=512, out_dtype=jnp.float32):
    """y[h] = act((maybe_normalize(x[bh]) @ wt[h]) * scale[h] + shift[h]).

    x  : (Bx, M, K) with Bx in {1, H}.  Bx == 1 broadcasts the same activations
         (e.g. the shared backbone features) to every head h.
    wt : (H, K, N) pre-transposed per-head weights.
    scale/shift : (H, N) or None — folded eval-mode BatchNorm1d and/or bias.
    """
    Bx, M, K = x.shape
    H, K2, N = wt.shape
    assert K == K2 and Bx in (1, H)

    if normalize_x and _round_up(K, 128) > _NORM_FUSE_MAX_K:
        # Reduction dim too large for a single K block: normalize separately.
        x = l2_normalize_batched(x)
        normalize_x = False

    apply_affine = (scale is not None) or (shift is not None)
    if scale is None:
        scale = jnp.ones((H, N), jnp.float32)
    if shift is None:
        shift = jnp.zeros((H, N), jnp.float32)

    if compute_dtype is not None:
        x = x.astype(compute_dtype)
        wt = wt.astype(compute_dtype)

    # Tile sizes: MXU/lane aligned, capped by the padded problem size so the
    # grid always covers the array exactly.  NOTE: for production shapes
    # tm/tn/tk are the knobs to sweep.
    tm = min(tm, _round_up(M, 8))
    tn = min(tn, _round_up(N, 128))
    if normalize_x:
        tk = _round_up(K, 128)          # single K block -> row norm sees whole row
    else:
        tk = min(tk, _round_up(K, 128))

    Mp, Kp, Np = _round_up(M, tm), _round_up(K, tk), _round_up(N, tn)

    if (Mp, Kp) != (M, K):
        x = jnp.pad(x, ((0, 0), (0, Mp - M), (0, Kp - K)))
    if (Kp, Np) != (K, N):
        wt = jnp.pad(wt, ((0, 0), (0, Kp - K), (0, Np - N)))
    if Np != N:
        scale = jnp.pad(scale, ((0, 0), (0, Np - N)))
        shift = jnp.pad(shift, ((0, 0), (0, Np - N)))
    scale = scale.reshape(H, 1, Np).astype(jnp.float32)
    shift = shift.reshape(H, 1, Np).astype(jnp.float32)

    if Bx == 1:
        x_map = lambda h, i, j, k: (0, i, k)
    else:
        x_map = lambda h, i, j, k: (h, i, k)

    grid = (H, Mp // tm, Np // tn, Kp // tk)
    kernel = functools.partial(_bmm_kernel, apply_affine=apply_affine,
                               apply_relu=relu, normalize_x=normalize_x)

    out = pl.pallas_call(
        kernel,
        out_shape=jax.ShapeDtypeStruct((H, Mp, Np), out_dtype),
        grid_spec=pltpu.PrefetchScalarGridSpec(
            num_scalar_prefetch=0,
            grid=grid,
            in_specs=[
                pl.BlockSpec((1, tm, tk), x_map),                     # x tile
                pl.BlockSpec((1, tk, tn), lambda h, i, j, k: (h, k, j)),  # W^T tile
                pl.BlockSpec((1, 1, tn), lambda h, i, j, k: (h, 0, j)),   # scale
                pl.BlockSpec((1, 1, tn), lambda h, i, j, k: (h, 0, j)),   # shift
            ],
            out_specs=pl.BlockSpec((1, tm, tn), lambda h, i, j, k: (h, i, j)),
            scratch_shapes=[pltpu.VMEM((tm, tn), jnp.float32)],       # f32 accumulator
        ),
        compiler_params=pltpu.CompilerParams(
            dimension_semantics=("parallel", "parallel", "parallel", "arbitrary"),
        ),
    )(x, wt, scale, shift)

    return out[:, :M, :N]


# ----------------------------------------------------------------------------
# Parameters (PyTorch-style init) and the two forward implementations
# ----------------------------------------------------------------------------
def _init_linear(key, in_dim, out_dim):
    kw, kb = jax.random.split(key)
    bound = 1.0 / jnp.sqrt(jnp.float32(in_dim))
    w = jax.random.uniform(kw, (out_dim, in_dim), jnp.float32, -bound, bound)
    b = jax.random.uniform(kb, (out_dim,), jnp.float32, -bound, bound)
    return w, b


def _init_bn(key, dim):
    k1, k2, k3, k4 = jax.random.split(key, 4)
    gamma = jax.random.uniform(k1, (dim,), jnp.float32, 0.5, 1.5)
    beta = 0.1 * jax.random.normal(k2, (dim,), jnp.float32)
    mean = 0.1 * jax.random.normal(k3, (dim,), jnp.float32)
    var = jax.random.uniform(k4, (dim,), jnp.float32, 0.5, 1.5)
    return gamma, beta, mean, var


def init_heads_params(key, feat_dim, hidden_dim, proj_dim, num_labeled,
                      num_unlabeled, overcluster_factor, num_heads,
                      num_hidden_layers):
    params = {}
    key, klab = jax.random.split(key)
    bound = 1.0 / jnp.sqrt(jnp.float32(feat_dim))
    params["w_lab"] = jax.random.uniform(
        klab, (num_labeled, feat_dim), jnp.float32, -bound, bound)

    def make_multihead(key, num_protos):
        heads = []
        for _ in range(num_heads):
            layers = []
            in_dim = feat_dim
            for _ in range(num_hidden_layers):
                key, k1, k2 = jax.random.split(key, 3)
                w, b = _init_linear(k1, in_dim, hidden_dim)
                layers.append({"w": w, "b": b, "bn": _init_bn(k2, hidden_dim)})
                in_dim = hidden_dim
            key, k3, k4 = jax.random.split(key, 3)
            w_out, b_out = _init_linear(k3, in_dim, proj_dim)
            bound_p = 1.0 / jnp.sqrt(jnp.float32(proj_dim))
            w_proto = jax.random.uniform(
                k4, (num_protos, proj_dim), jnp.float32, -bound_p, bound_p)
            # MultiHead.__init__ calls normalize_prototypes() at construction.
            w_proto = w_proto / jnp.maximum(
                jnp.linalg.norm(w_proto, axis=1, keepdims=True), 1e-12)
            heads.append({"hidden": layers, "w_out": w_out, "b_out": b_out,
                          "w_proto": w_proto})
        return key, heads

    key, params["unlab"] = make_multihead(key, num_unlabeled)
    key, params["unlab_over"] = make_multihead(
        key, num_unlabeled * overcluster_factor)
    return params


def prepare_kernel_params(params):
    """Stack per-head weights, pre-transpose to (K, N) and fold bias +
    eval-mode BN into per-channel scale/shift."""
    heads = params["unlab"] + params["unlab_over"]      # both groups share MLP shapes
    num_layers = len(heads[0]["hidden"])

    hidden_layers = []
    for li in range(num_layers):
        wts, scales, shifts = [], [], []
        for h in heads:
            layer = h["hidden"][li]
            gamma, beta, mean, var = layer["bn"]
            scale = gamma / jnp.sqrt(var + _BN_EPS)
            shift = beta + (layer["b"] - mean) * scale
            wts.append(layer["w"].T)
            scales.append(scale)
            shifts.append(shift)
        hidden_layers.append({"wt": jnp.stack(wts),       # (2H, K, hidden)
                              "scale": jnp.stack(scales),  # (2H, hidden)
                              "shift": jnp.stack(shifts)})

    return {
        "w_lab_t": params["w_lab"].T[None],                               # (1, feat, n_lab)
        "hidden_layers": hidden_layers,
        "w_out_t": jnp.stack([h["w_out"].T for h in heads]),              # (2H, hidden, proj)
        "b_out": jnp.stack([h["b_out"] for h in heads]),                  # (2H, proj)
        "w_proto_unlab_t": jnp.stack([h["w_proto"].T for h in params["unlab"]]),
        "w_proto_over_t": jnp.stack([h["w_proto"].T for h in params["unlab_over"]]),
        "num_heads": len(params["unlab"]),
    }


def forward_heads_pallas(kp, feats, *, compute_dtype=jnp.bfloat16):
    """Pallas implementation of MultiHeadResNet.forward_heads(feats)."""
    out = {"feats": feats}
    x1 = feats[None]  # (1, M, feat_dim) — broadcast to all heads via index_map

    # head_lab: fused F.normalize(feats) + bias-free prototype matmul.
    out["logits_lab"] = fused_linear_batched(
        x1, kp["w_lab_t"], normalize_x=True, compute_dtype=compute_dtype)[0]

    # All (unlab + over-cluster) heads batched into single pallas_calls.
    nh = kp["num_heads"]
    h = x1
    for layer in kp["hidden_layers"]:
        # Linear + folded BatchNorm1d + ReLU, fused in the epilogue.
        h = fused_linear_batched(h, layer["wt"], scale=layer["scale"],
                                 shift=layer["shift"], relu=True,
                                 compute_dtype=compute_dtype)
    # Final projector Linear (bias folded into shift).
    h = fused_linear_batched(h, kp["w_out_t"], shift=kp["b_out"],
                             compute_dtype=compute_dtype)
    z = l2_normalize_batched(h)                          # (2*nh, M, proj)
    z_unlab, z_over = z[:nh], z[nh:]

    out["proj_feats_unlab"] = z_unlab
    out["proj_feats_unlab_over"] = z_over
    out["logits_unlab"] = fused_linear_batched(
        z_unlab, kp["w_proto_unlab_t"], compute_dtype=compute_dtype)
    out["logits_unlab_over"] = fused_linear_batched(
        z_over, kp["w_proto_over_t"], compute_dtype=compute_dtype)
    return out


def forward_heads_ref(params, feats):
    """Pure-JAX f32 reference (unfolded BN eval formula, HIGHEST precision)."""
    hi = jax.lax.Precision.HIGHEST

    def l2n(x):
        return x / jnp.maximum(jnp.linalg.norm(x, axis=-1, keepdims=True), 1e-12)

    out = {"feats": feats}
    out["logits_lab"] = jnp.dot(l2n(feats), params["w_lab"].T, precision=hi)

    def run_multihead(heads):
        logits, projs = [], []
        for head in heads:
            h = feats
            for layer in head["hidden"]:
                gamma, beta, mean, var = layer["bn"]
                h = jnp.dot(h, layer["w"].T, precision=hi) + layer["b"]
                h = (h - mean) / jnp.sqrt(var + _BN_EPS) * gamma + beta
                h = jnp.maximum(h, 0.0)
            h = jnp.dot(h, head["w_out"].T, precision=hi) + head["b_out"]
            z = l2n(h)
            logits.append(jnp.dot(z, head["w_proto"].T, precision=hi))
            projs.append(z)
        return jnp.stack(logits), jnp.stack(projs)

    out["logits_unlab"], out["proj_feats_unlab"] = run_multihead(params["unlab"])
    out["logits_unlab_over"], out["proj_feats_unlab_over"] = run_multihead(
        params["unlab_over"])
    return out


if __name__ == "__main__":
    # Small shapes consistent with the module (feat_dim from the encoder,
    # hidden/proj dims of the MLP heads, labeled/unlabeled prototype counts).
    batch = 16
    feat_dim = 256
    hidden_dim = 64
    proj_dim = 32
    num_labeled = 10
    num_unlabeled = 16
    overcluster_factor = 3
    num_heads = 2
    num_hidden_layers = 1

    key = jax.random.PRNGKey(0)
    kparam, kfeat = jax.random.split(key)
    params = init_heads_params(kparam, feat_dim, hidden_dim, proj_dim,
                               num_labeled, num_unlabeled, overcluster_factor,
                               num_heads, num_hidden_layers)
    kp = prepare_kernel_params(params)
    feats = jax.random.normal(kfeat, (batch, feat_dim), dtype=jnp.float32)

    # bf16 MXU inputs + f32 accumulation (perf-recommended path).
    out = forward_heads_pallas(kp, feats, compute_dtype=jnp.bfloat16)
    out = jax.block_until_ready(out)

    ref = forward_heads_ref(params, feats)

    assert out["logits_lab"].shape == (batch, num_labeled)
    assert out["logits_unlab"].shape == (num_heads, batch, num_unlabeled)
    assert out["proj_feats_unlab"].shape == (num_heads, batch, proj_dim)
    assert out["logits_unlab_over"].shape == (
        num_heads, batch, num_unlabeled * overcluster_factor)
    assert out["proj_feats_unlab_over"].shape == (num_heads, batch, proj_dim)

    for name in ("logits_lab", "logits_unlab", "proj_feats_unlab",
                 "logits_unlab_over", "proj_feats_unlab_over"):
        assert jnp.allclose(out[name], ref[name], atol=7.5e-2, rtol=7.5e-2), name

    print("KERNEL_OK")
</pallas_src>

<mosaic_0001>
module attributes {stable_mosaic.version = 11 : i64} {
  func.func @_bmm_kernel(%arg0: i32, %arg1: i32, %arg2: i32, %arg3: i32, %arg4: memref<1x16x256xbf16, #tpu.memory_space<vmem>>, %arg5: memref<1x256x128xbf16, #tpu.memory_space<vmem>>, %arg6: memref<1x1x128xf32, #tpu.memory_space<vmem>>, %arg7: memref<1x1x128xf32, #tpu.memory_space<vmem>>, %arg8: memref<1x16x128xf32, #tpu.memory_space<vmem>>, %arg9: memref<16x128xf32, #tpu.memory_space<vmem>>) attributes {dimension_semantics = [#tpu.dimension_semantics<parallel>, #tpu.dimension_semantics<parallel>, #tpu.dimension_semantics<parallel>, #tpu.dimension_semantics<arbitrary>], iteration_bounds = array<i64: 1, 1, 1, 1>, scalar_prefetch = 0 : i64, scratch_operands = 1 : i64, tpu.core_type = #tpu.core_type<tc>, window_params = [{transform_indices = @transform_0, window_bounds = array<i64: 1, 16, 256>}, {transform_indices = @transform_1, window_bounds = array<i64: 1, 256, 128>}, {transform_indices = @transform_2, window_bounds = array<i64: 1, 1, 128>}, {transform_indices = @transform_3, window_bounds = array<i64: 1, 1, 128>}, {transform_indices = @transform_4, window_bounds = array<i64: 1, 16, 128>}]} {
    %c0_i32 = arith.constant 0 : i32
    %0 = arith.cmpi eq, %arg3, %c0_i32 : i32
    %1 = arith.extui %0 : i1 to i32
    %c0_i32_0 = arith.constant 0 : i32
    %2 = arith.cmpi ne, %1, %c0_i32_0 : i32
    scf.if %2 {
      %cst_15 = arith.constant 0.000000e+00 : f32
      %26 = vector.broadcast %cst_15 : f32 to vector<16x128xf32>
      %c0_16 = arith.constant 0 : index
      %c0_17 = arith.constant 0 : index
      %27 = vector.load %arg9[%c0_16, %c0_17] : memref<16x128xf32, #tpu.memory_space<vmem>>, vector<16x128xf32>
      tpu.vector_store %arg9[%c0_16, %c0_17], %26 {strides = array<i32>} : memref<16x128xf32, #tpu.memory_space<vmem>>, vector<16x128xf32>,
    } else {
    }
    %c0 = arith.constant 0 : index
    %c0_1 = arith.constant 0 : index
    %c0_2 = arith.constant 0 : index
    %3 = vector.load %arg4[%c0, %c0_1, %c0_2] : memref<1x16x256xbf16, #tpu.memory_space<vmem>>, vector<1x16x256xbf16>
    %4 = vector.shape_cast %3 : vector<1x16x256xbf16> to vector<16x256xbf16>
    %5 = arith.extf %4 : vector<16x256xbf16> to vector<16x256xf32>
    %6 = arith.mulf %5, %5 : vector<16x256xf32>
    %cst = arith.constant dense<0.000000e+00> : vector<16xf32>
    %7 = vector.multi_reduction <add>, %6, %cst [1] : vector<16x256xf32> to vector<16xf32>
    %8 = vector.shape_cast %7 : vector<16xf32> to vector<16x1xf32>
    %9 = math.sqrt %8 : vector<16x1xf32>
    %cst_3 = arith.constant 9.99999996E-13 : f32
    %10 = vector.broadcast %cst_3 : f32 to vector<16x1xf32>
    %11 = arith.maximumf %9, %10 : vector<16x1xf32>
    %cst_4 = arith.constant 1.000000e+00 : f32
    %12 = vector.broadcast %cst_4 : f32 to vector<16x1xf32>
    %13 = arith.divf %12, %11 : vector<16x1xf32>
    %14 = vector.broadcast %13 : vector<16x1xf32> to vector<16x256xf32>
    %15 = arith.mulf %5, %14 : vector<16x256xf32>
    %16 = arith.truncf %15 : vector<16x256xf32> to vector<16x256xbf16>
    %c0_5 = arith.constant 0 : index
    %c0_6 = arith.constant 0 : index
    %17 = vector.load %arg9[%c0_5, %c0_6] : memref<16x128xf32, #tpu.memory_space<vmem>>, vector<16x128xf32>
    %c0_7 = arith.constant 0 : index
    %c0_8 = arith.constant 0 : index
    %c0_9 = arith.constant 0 : index
    %18 = vector.load %arg5[%c0_7, %c0_8, %c0_9] : memref<1x256x128xbf16, #tpu.memory_space<vmem>>, vector<1x256x128xbf16>
    %19 = vector.shape_cast %18 : vector<1x256x128xbf16> to vector<256x128xbf16>
    %cst_10 = arith.constant dense<0.000000e+00> : vector<16x128xf32>
    %20 = tpu.matmul %16, %19, %cst_10 {dimension_numbers = #tpu.dot_dimension_numbers<[1], [0], [0], [1], [0, 0, 1, 1], [], []>} : vector<16x256xbf16>, vector<256x128xbf16>, vector<16x128xf32> -> vector<16x128xf32>
    %21 = arith.addf %17, %20 : vector<16x128xf32>
    %c0_11 = arith.constant 0 : index
    %c0_12 = arith.constant 0 : index
    %22 = vector.load %arg9[%c0_11, %c0_12] : memref<16x128xf32, #tpu.memory_space<vmem>>, vector<16x128xf32>
    tpu.vector_store %arg9[%c0_11, %c0_12], %21 {strides = array<i32>} : memref<16x128xf32, #tpu.memory_space<vmem>>, vector<16x128xf32>,
    %c0_i32_13 = arith.constant 0 : i32
    %23 = arith.cmpi eq, %arg3, %c0_i32_13 : i32
    %24 = arith.extui %23 : i1 to i32
    %c0_i32_14 = arith.constant 0 : i32
    %25 = arith.cmpi ne, %24, %c0_i32_14 : i32
    scf.if %25 {
      %c0_15 = arith.constant 0 : index
      %c0_16 = arith.constant 0 : index
      %26 = vector.load %arg9[%c0_15, %c0_16] : memref<16x128xf32, #tpu.memory_space<vmem>>, vector<16x128xf32>
      %c0_17 = arith.constant 0 : index
      %c0_18 = arith.constant 0 : index
      %c0_19 = arith.constant 0 : index
      %27 = vector.load %arg8[%c0_17, %c0_18, %c0_19] : memref<1x16x128xf32, #tpu.memory_space<vmem>>, vector<1x16x128xf32>
      %28 = vector.shape_cast %27 : vector<1x16x128xf32> to vector<16x128xf32>
      %29 = vector.shape_cast %26 : vector<16x128xf32> to vector<1x16x128xf32>
      tpu.vector_store %arg8[%c0_17, %c0_18, %c0_19], %29 {strides = array<i32>} : memref<1x16x128xf32, #tpu.memory_space<vmem>>, vector<1x16x128xf32>,
    } else {
    }
    return
  }
  func.func @transform_0(%arg0: i32, %arg1: i32, %arg2: i32, %arg3: i32) -> (i32, i32, i32) {
    %c0_i32 = arith.constant 0 : i32
    %c0_i32_0 = arith.constant 0 : i32
    return %c0_i32, %arg1, %arg3 : i32, i32, i32
  }
  func.func @transform_1(%arg0: i32, %arg1: i32, %arg2: i32, %arg3: i32) -> (i32, i32, i32) {
    %c0_i32 = arith.constant 0 : i32
    return %arg0, %arg3, %arg2 : i32, i32, i32
  }
  func.func @transform_2(%arg0: i32, %arg1: i32, %arg2: i32, %arg3: i32) -> (i32, i32, i32) {
    %c0_i32 = arith.constant 0 : i32
    %c0_i32_0 = arith.constant 0 : i32
    return %arg0, %c0_i32, %arg2 : i32, i32, i32
  }
  func.func @transform_3(%arg0: i32, %arg1: i32, %arg2: i32, %arg3: i32) -> (i32, i32, i32) {
    %c0_i32 = arith.constant 0 : i32
    %c0_i32_0 = arith.constant 0 : i32
    return %arg0, %c0_i32, %arg2 : i32, i32, i32
  }
  func.func @transform_4(%arg0: i32, %arg1: i32, %arg2: i32, %arg3: i32) -> (i32, i32, i32) {
    %c0_i32 = arith.constant 0 : i32
    return %arg0, %arg1, %arg2 : i32, i32, i32
  }
}

</mosaic_0001>

<llo_original>
// kernel: tpu_custom_call.1
$region0: #{tpu_custom_call.1}
  #allocation0 [shape = 'u32[]', space=smem, size = 0x4, offset = 0x4, fixed_abs, tag = 'smem constant byte address 0x4 - core index']
  #allocation1 [shape = 'u32[144,128]{1,0:T(1,128)}', space=vmem, size = 0x12000, scoped, tag = 'internal scratch']
  #allocation2 [shape = 'f32[16,128]{1,0:T(8,128)}', space=vmem, size = 0x2000, scoped, tag = 'scratch operand']
  %s0 = inlined_call_operand.hbm [shape: bf16[1,16,256], index: 0, kind: input, shape index: {}]
  %s1 = inlined_call_operand.hbm [shape: bf16[1,256,128], index: 1, kind: input, shape index: {}]
  %s2 = inlined_call_operand.vmem [shape: f32[1,1,128], index: 2, kind: input, shape index: {}]
  %s3 = inlined_call_operand.vmem [shape: f32[1,1,128], index: 3, kind: input, shape index: {}]
  %s4 = inlined_call_operand.hbm [shape: f32[1,16,128], index: 4, kind: output, shape index: {}]
  %s5 = sld [smem:[#allocation0]]
  $region42: #{tpu_custom_call.1} parent=0
    _
  %s7 = ssub.s32 1, %s5
  %s8 = scalar_select 0, %s7, %s5
  $region1: #{tpu_custom_call.1} parent=0
    #allocation3 [shape = 'u8[8192]{0}', space=vmem, size = 0x2000, scoped, tag = 'input window, operand 0, single buffered']
    #allocation4 [shape = 's32[1]{0}', space=sflag, size = 0x4, scoped, tag = 'scoped memory for tpu_custom_call.1']
    #allocation5 [shape = 's32[1]{0}', space=sflag, size = 0x4, scoped, tag = 'scoped memory for tpu_custom_call.1']
    #allocation6 [shape = 'u8[65536]{0}', space=vmem, size = 0x10000, scoped, tag = 'input window, operand 1, single buffered']
    #allocation7 [shape = 's32[1]{0}', space=sflag, size = 0x4, scoped, tag = 'scoped memory for tpu_custom_call.1']
    #allocation8 [shape = 'u8[8192]{0}', space=vmem, size = 0x2000, scoped, tag = 'output window, operand 0, single buffered']
    %9 = vsyncpa [#allocation4], 0
    %10 = vsyncpa [#allocation7], 0
    %11 = vsyncpa [#allocation5], 0
    // Predicated region
    $region2: #{tpu_custom_call.1} parent=1 // pred_check
      _
    $region3: #{tpu_custom_call.1} parent=1 // pred_check_branch
      %13 = sbr.rel (0) target = $region5
    $region4: #{tpu_custom_call.1} parent=1 // pred_region
      %s15 = ssub.s32 256, 256
      %16 = vsyncadd [#allocation4], %s15
      %s17 = sshll.u32 [#allocation3], 4
      %s18 = int_to_ptr.vmem [resolvable:$true] %s17
      %23 = dma.hbm_to_vmem [thread:$0]  %s0, 256, %s18, [#allocation4], 128, 128, 8
    $region5: #{tpu_custom_call.1} parent=1 // pred_fallthru
      _
    // Predicated region
    $region6: #{tpu_custom_call.1} parent=1 // pred_check
      _
    $region7: #{tpu_custom_call.1} parent=1 // pred_check_branch
      %25 = sbr.rel (0) target = $region9
    $region8: #{tpu_custom_call.1} parent=1 // pred_region
      %s27 = ssub.s32 2048, 2048
      %28 = vsyncadd [#allocation7], %s27
      %s29 = sshll.u32 [#allocation6], 4
      %s30 = int_to_ptr.vmem [resolvable:$true] %s29
      %35 = dma.hbm_to_vmem [thread:$0]  %s1, 2048, %s30, [#allocation7], 64, 64, 4
    $region9: #{tpu_custom_call.1} parent=1 // pred_fallthru
      _
    // Predicated region
    $region10: #{tpu_custom_call.1} parent=1 // pred_check
      _
    $region11: #{tpu_custom_call.1} parent=1 // pred_check_branch
      %37 = sbr.rel (0) target = $region13
    $region12: #{tpu_custom_call.1} parent=1 // pred_region
      _
    $region13: #{tpu_custom_call.1} parent=1 // pred_fallthru
      _
    // Predicated region
    $region14: #{tpu_custom_call.1} parent=1 // pred_check
      _
    $region15: #{tpu_custom_call.1} parent=1 // pred_check_branch
      %39 = sbr.rel (0) target = $region17
    $region16: #{tpu_custom_call.1} parent=1 // pred_region
      _
    $region17: #{tpu_custom_call.1} parent=1 // pred_fallthru
      _
    // Predicated region
    $region18: #{tpu_custom_call.1} parent=1 // pred_check
      _
    $region19: #{tpu_custom_call.1} parent=1 // pred_check_branch
      %41 = sbr.rel (0) target = $region21
    $region20: #{tpu_custom_call.1} parent=1 // pred_region
      %42 = dma.done [#allocation4], 256
    $region21: #{tpu_custom_call.1} parent=1 // pred_fallthru
      _
    // Predicated region
    $region22: #{tpu_custom_call.1} parent=1 // pred_check
      _
    $region23: #{tpu_custom_call.1} parent=1 // pred_check_branch
      %44 = sbr.rel (0) target = $region25
    $region24: #{tpu_custom_call.1} parent=1 // pred_region
      %45 = dma.done [#allocation7], 2048
    $region25: #{tpu_custom_call.1} parent=1 // pred_fallthru
      _
    %p47 = scmp.eq.s32.totalorder 0, 0
    // Predicated region
    $region26: #{tpu_custom_call.1} parent=1 // pred_check
      %p48 = pneg %p47
    $region27: #{tpu_custom_call.1} parent=1 // pred_check_branch
      %50 = sbr.rel (%p48) target = $region29
    $region28: #{tpu_custom_call.1} parent=1 // pred_region
      %51 = vst [vmem:[#allocation2] sm:$0xff] 0.0
      %52 = vst [vmem:[#allocation2 + $0x8] sm:$0xff] 0.0
    $region29: #{tpu_custom_call.1} parent=1 // pred_fallthru
      _
    %v53 = vld [vmem:[#allocation3] sm:$0xff]
    %v54 = vld [vmem:[#allocation3 + $0x8] sm:$0xff]
    %v55 = vunpack.c.l.bf16 %v53
    %v56 = vunpack.c.h.bf16 %v53
    %v57 = vunpack.c.l.bf16 %v54
    %v58 = vunpack.c.h.bf16 %v54
    %v59 = vmul.f32 %v55, %v55
    %v60 = vmul.f32 %v56, %v56
    %v61 = vmul.f32 %v57, %v57
    %v62 = vmul.f32 %v58, %v58
    %v63 = vadd.f32 %v59, %v60
    %64 = vadd.xlane.f32.xlu0 %v63
    %v65 = vpop.xlane.xlu0 %64
    %v66 = vadd.f32 %v61, %v62
    %67 = vadd.xlane.f32.xlu0 %v66
    %v68 = vpop.xlane.xlu0 %67
    %v69 = vrsqrt.pop %v65
    %v70 = vmul.f32 %v65, %v69
    %vm71 = vcmp.eq.f32.partialorder %v65, inf
    %v72 = vsel %vm71, %v65, %v70
    %vm73 = vcmp.eq.f32.partialorder %v65, 0.0
    %v74 = vand.u32 %v65, 2147483648
    %v75 = vsel %vm73, %v74, %v72
    %v76 = vrsqrt.pop %v68
    %v77 = vmul.f32 %v68, %v76
    %vm78 = vcmp.eq.f32.partialorder %v68, inf
    %v79 = vsel %vm78, %v68, %v77
    %vm80 = vcmp.eq.f32.partialorder %v68, 0.0
    %v81 = vand.u32 %v68, 2147483648
    %v82 = vsel %vm80, %v81, %v79
    %v83 = vmax.f32 %v75, 1e-12
    %v84 = vmax.f32 %v82, 1e-12
    %v85 = vrcp.pop %v83
    %v86 = vmul.f32 1.0, %v85
    %v87 = vrcp.pop %v84
    %v88 = vmul.f32 1.0, %v87
    %v89 = vmul.f32 %v55, %v86
    %v90 = vmul.f32 %v56, %v86
    %v91 = vmul.f32 %v57, %v88
    %v92 = vmul.f32 %v58, %v88
    %v93 = vpack.c.bf16 %v91, %v89
    %v94 = vpack.c.bf16 %v92, %v90
    %v95 = vld [vmem:[#allocation2] sm:$0xff]
    %v96 = vld [vmem:[#allocation2 + $0x8] sm:$0xff]
    %v97 = vld [vmem:[#allocation6] sm:$0xf]
    %v98 = vld [vmem:[#allocation6 + $0x4] sm:$0xf]
    %v99 = vld [vmem:[#allocation6 + $0x8] sm:$0xf]
    %v100 = vld [vmem:[#allocation6 + $0xc] sm:$0xf]
    %v101 = vld [vmem:[#allocation6 + $0x10] sm:$0xf]
    %v102 = vld [vmem:[#allocation6 + $0x14] sm:$0xf]
    %v103 = vld [vmem:[#allocation6 + $0x18] sm:$0xf]
    %v104 = vld [vmem:[#allocation6 + $0x1c] sm:$0xf]
    %v105 = vld [vmem:[#allocation6 + $0x20] sm:$0xf]
    %v106 = vld [vmem:[#allocation6 + $0x24] sm:$0xf]
    %v107 = vld [vmem:[#allocation6 + $0x28] sm:$0xf]
    %v108 = vld [vmem:[#allocation6 + $0x2c] sm:$0xf]
    %v109 = vld [vmem:[#allocation6 + $0x30] sm:$0xf]
    %v110 = vld [vmem:[#allocation6 + $0x34] sm:$0xf]
    %v111 = vld [vmem:[#allocation6 + $0x38] sm:$0xf]
    %v112 = vld [vmem:[#allocation6 + $0x3c] sm:$0xf]
    %v113 = vld [vmem:[#allocation6 + $0x40] sm:$0xf]
    %v114 = vld [vmem:[#allocation6 + $0x44] sm:$0xf]
    %v115 = vld [vmem:[#allocation6 + $0x48] sm:$0xf]
    %v116 = vld [vmem:[#allocation6 + $0x4c] sm:$0xf]
    %v117 = vld [vmem:[#allocation6 + $0x50] sm:$0xf]
    %v118 = vld [vmem:[#allocation6 + $0x54] sm:$0xf]
    %v119 = vld [vmem:[#allocation6 + $0x58] sm:$0xf]
    %v120 = vld [vmem:[#allocation6 + $0x5c] sm:$0xf]
    %v121 = vld [vmem:[#allocation6 + $0x60] sm:$0xf]
    %v122 = vld [vmem:[#allocation6 + $0x64] sm:$0xf]
    %v123 = vld [vmem:[#allocation6 + $0x68] sm:$0xf]
    %v124 = vld [vmem:[#allocation6 + $0x6c] sm:$0xf]
    %v125 = vld [vmem:[#allocation6 + $0x70] sm:$0xf]
    %v126 = vld [vmem:[#allocation6 + $0x74] sm:$0xf]
    %v127 = vld [vmem:[#allocation6 + $0x78] sm:$0xf]
    %v128 = vld [vmem:[#allocation6 + $0x7c] sm:$0xf]
    %v161 = vunpack.c.l.b16 %v97
    %v162 = vunpack.c.l.b16 %v98
    %v163 = vunpack.c.l.b16 %v99
    %v164 = vunpack.c.l.b16 %v100
    %v165 = vunpack.c.l.b16 %v101
    %v166 = vunpack.c.l.b16 %v102
    %v167 = vunpack.c.l.b16 %v103
    %v168 = vunpack.c.l.b16 %v104
    %v169 = vunpack.c.l.b16 %v105
    %v170 = vunpack.c.l.b16 %v106
    %v171 = vunpack.c.l.b16 %v107
    %v172 = vunpack.c.l.b16 %v108
    %v173 = vunpack.c.l.b16 %v109
    %v174 = vunpack.c.l.b16 %v110
    %v175 = vunpack.c.l.b16 %v111
    %v176 = vunpack.c.l.b16 %v112
    %v177 = vunpack.c.l.b16 %v113
    %v178 = vunpack.c.l.b16 %v114
    %v179 = vunpack.c.l.b16 %v115
    %v180 = vunpack.c.l.b16 %v116
    %v181 = vunpack.c.l.b16 %v117
    %v182 = vunpack.c.l.b16 %v118
    %v183 = vunpack.c.l.b16 %v119
    %v184 = vunpack.c.l.b16 %v120
    %v185 = vunpack.c.l.b16 %v121
    %v186 = vunpack.c.l.b16 %v122
    %v187 = vunpack.c.l.b16 %v123
    %v188 = vunpack.c.l.b16 %v124
    %v189 = vunpack.c.l.b16 %v125
    %v190 = vunpack.c.l.b16 %v126
    %v191 = vunpack.c.l.b16 %v127
    %v192 = vunpack.c.l.b16 %v128
    %v193 = vpack.c.b16 %v162, %v161
    %v194 = vpack.c.b16 %v164, %v163
    %v195 = vpack.c.b16 %v166, %v165
    %v196 = vpack.c.b16 %v168, %v167
    %v197 = vpack.c.b16 %v170, %v169
    %v198 = vpack.c.b16 %v172, %v171
    %v199 = vpack.c.b16 %v174, %v173
    %v200 = vpack.c.b16 %v176, %v175
    %v201 = vpack.c.b16 %v178, %v177
    %v202 = vpack.c.b16 %v180, %v179
    %v203 = vpack.c.b16 %v182, %v181
    %v204 = vpack.c.b16 %v184, %v183
    %v205 = vpack.c.b16 %v186, %v185
    %v206 = vpack.c.b16 %v188, %v187
    %v207 = vpack.c.b16 %v190, %v189
    %v208 = vpack.c.b16 %v192, %v191
    %225 = vmatprep.subr.bf16.mxu0 0
    %226 = vmatpush1.bf16.msra.mxu0 %v200
    %227 = vmatprep.subr.bf16.mxu0 0
    %228 = vmatpush1.bf16.msra.mxu0 %v199
    %229 = vmatprep.subr.bf16.mxu0 0
    %230 = vmatpush1.bf16.msra.mxu0 %v198
    %231 = vmatprep.subr.bf16.mxu0 0
    %232 = vmatpush1.bf16.msra.mxu0 %v197
    %233 = vmatprep.subr.bf16.mxu0 0
    %234 = vmatpush1.bf16.msra.mxu0 %v196
    %235 = vmatprep.subr.bf16.mxu0 0
    %236 = vmatpush1.bf16.msra.mxu0 %v195
    %237 = vmatprep.subr.bf16.mxu0 0
    %238 = vmatpush1.bf16.msra.mxu0 %v194
    %239 = vmatprep.subr.bf16.mxu0 0
    %240 = vmatpush1.bf16.msra.mxu0 %v193
    %241 = vmatprep.subr.bf16.mxu0 0
    %242 = vmatpush2.bf16.msra.mxu0 %v208
    %243 = vmatprep.subr.bf16.mxu0 0
    %244 = vmatpush2.bf16.msra.mxu0 %v207
    %245 = vmatprep.subr.bf16.mxu0 0
    %246 = vmatpush2.bf16.msra.mxu0 %v206
    %247 = vmatprep.subr.bf16.mxu0 0
    %248 = vmatpush2.bf16.msra.mxu0 %v205
    %249 = vmatprep.subr.bf16.mxu0 0
    %250 = vmatpush2.bf16.msra.mxu0 %v204
    %251 = vmatprep.subr.bf16.mxu0 0
    %252 = vmatpush2.bf16.msra.mxu0 %v203
    %253 = vmatprep.subr.bf16.mxu0 0
    %254 = vmatpush2.bf16.msra.mxu0 %v202
    %255 = vmatprep.subr.bf16.mxu0 0
    %256 = vmatpush2.bf16.msra.mxu0 %v201
    %257 = vmatprep.mubr.bf16.mxu0 %v94
    %258 = vmatmul.mubr.bf16.gmra.mxu0 %v93
    %v259 = vpop.f32.mrf.mxu0
    %v260 = vadd.f32 0.0, %v259
    %v261 = vpop.f32.mrf.mxu0
    %v262 = vpop.f32.mrf.mxu0
    %v263 = vadd.f32 0.0, %v262
    %v264 = vpop.f32.mrf.mxu0
    %265 = vdwg.mxu0
    %v266 = vadd.f32 %v95, %v260
    %v267 = vadd.f32 %v96, %v263
    %268 = vst [vmem:[#allocation2] sm:$0xff] %v266
    %269 = vst [vmem:[#allocation2 + $0x8] sm:$0xff] %v267
    // Predicated region
    $region30: #{tpu_custom_call.1} parent=1 // pred_check
      %p270 = pneg %p47
    $region31: #{tpu_custom_call.1} parent=1 // pred_check_branch
      %272 = sbr.rel (%p270) target = $region33
    $region32: #{tpu_custom_call.1} parent=1 // pred_region
      %v273 = vld [vmem:[#allocation2] sm:$0xff]
      %v274 = vld [vmem:[#allocation2 + $0x8] sm:$0xff]
      %275 = vst [vmem:[#allocation8] sm:$0xff] %v273
      %276 = vst [vmem:[#allocation8 + $0x8] sm:$0xff] %v274
    $region33: #{tpu_custom_call.1} parent=1 // pred_fallthru
      _
    // Predicated region
    $region34: #{tpu_custom_call.1} parent=1 // pred_check
      _
    $region35: #{tpu_custom_call.1} parent=1 // pred_check_branch
      %278 = sbr.rel (0) target = $region37
    $region36: #{tpu_custom_call.1} parent=1 // pred_region
      %s280 = ssub.s32 256, 256
      %281 = vsyncadd [#allocation5], %s280
      %s282 = sshll.u32 [#allocation8], 4
      %s283 = int_to_ptr.vmem [resolvable:$true] %s282
      %288 = dma.vmem_to_hbm [thread:$0]  %s283, 256, %s4, [#allocation5], 128, 128, 8
    $region37: #{tpu_custom_call.1} parent=1 // pred_fallthru
      _
    // Predicated region
    $region38: #{tpu_custom_call.1} parent=1 // pred_check
      _
    $region39: #{tpu_custom_call.1} parent=1 // pred_check_branch
      %290 = sbr.rel (0) target = $region41
    $region40: #{tpu_custom_call.1} parent=1 // pred_region
      %291 = dma.done [#allocation5], 256
    $region41: #{tpu_custom_call.1} parent=1 // pred_fallthru
      _
    %292 = vsyncpa [#allocation4], 1
    %293 = vsyncpa [#allocation7], 1
    %294 = vsyncpa [#allocation5], 1

</llo_original>
